<compile_context>
chip_gen: v5e
topology: v5e:2x2
jax: 0.10.0
libtpu: 0.0.40
codegen_flags: <defaults>
</compile_context>

<pallas_src>
import functools

import jax
import jax.numpy as jnp
import numpy as np
from jax.experimental import pallas as pl
from jax.experimental.pallas import tpu as pltpu


# ----------------------------- in-kernel helpers -----------------------------

def _layernorm(x, gamma, beta, eps=1e-5):
    mu = jnp.mean(x, axis=-1, keepdims=True)
    var = jnp.mean((x - mu) * (x - mu), axis=-1, keepdims=True)  # biased, like torch
    return (x - mu) * jax.lax.rsqrt(var + eps) * gamma + beta


def _gelu_tanh(x):
    # tanh-form GELU; tanh lowers to the EUP (separate VLIW slot).
    # (|err| vs exact-erf GELU ~1e-3 abs, well inside the bf16-matmul error budget.)
    c = 0.7978845608028654  # sqrt(2/pi)
    return 0.5 * x * (1.0 + jnp.tanh(c * (x + 0.044715 * x * x * x)))


# --------------------------------- kernel ------------------------------------

def vit_block_kernel(x_ref,
                     ln1g_ref, ln1b_ref,
                     wqkv_ref, bqkv_ref,
                     ln2g_ref, ln2b_ref,
                     w1_ref, b1_ref, w2_ref, b2_ref,
                     o_ref,
                     attn_ref,           # VMEM scratch (bt, N, D) f32
                     *, n_heads):
    bt, N, D = x_ref.shape
    d_head = D // n_heads
    scale = 1.0 / float(np.sqrt(d_head))

    x3 = x_ref[...]                       # (bt, N, D) f32
    x2 = x3.reshape(bt * N, D)            # token-flattened rows for the dense matmuls

    # ---- norm1 + fused QKV projection: one (rows, D) @ (D, 3D) MXU matmul, bf16 in,
    #      f32 accumulate; bias add stays f32 on the VPU.
    xn = _layernorm(x2, ln1g_ref[0], ln1b_ref[0])
    qkv = jnp.dot(xn.astype(jnp.bfloat16), wqkv_ref[...],
                  preferred_element_type=jnp.float32) + bqkv_ref[0]     # (bt*N, 3D)

    q = qkv[:, 0 * D:1 * D].astype(jnp.bfloat16).reshape(bt, N, D)
    k = qkv[:, 1 * D:2 * D].astype(jnp.bfloat16).reshape(bt, N, D)
    v = qkv[:, 2 * D:3 * D].astype(jnp.bfloat16).reshape(bt, N, D)

    # ---- per-head attention (static, fully unrolled head loop), batched over the
    #      sequence-tile dim; head outputs written straight into the scratch slab.
    for h in range(n_heads):
        lo = h * d_head
        qh = q[:, :, lo:lo + d_head]
        kh = k[:, :, lo:lo + d_head]
        vh = v[:, :, lo:lo + d_head]
        # contraction on the trailing d_head dim -> no explicit kh.T transpose
        s = jnp.einsum('bnd,bmd->bnm', qh, kh,
                       preferred_element_type=jnp.float32) * scale      # (bt, N, N)
        s = s - jnp.max(s, axis=-1, keepdims=True)
        e = jnp.exp(s)
        inv = pl.reciprocal(jnp.sum(e, axis=-1, keepdims=True), approx=True)
        p = (e * inv).astype(jnp.bfloat16)
        attn_ref[:, :, lo:lo + d_head] = jnp.einsum(
            'bnm,bmd->bnd', p, vh, preferred_element_type=jnp.float32)

    out1 = x3 + attn_ref[...]             # residual 1 (f32)
    o1 = out1.reshape(bt * N, D)

    # ---- norm2 + MLP (Linear -> tanh-GELU -> Linear), bf16 MXU inputs.
    yn = _layernorm(o1, ln2g_ref[0], ln2b_ref[0])
    h1 = jnp.dot(yn.astype(jnp.bfloat16), w1_ref[...],
                 preferred_element_type=jnp.float32) + b1_ref[0]
    g = _gelu_tanh(h1)
    h2 = jnp.dot(g.astype(jnp.bfloat16), w2_ref[...],
                 preferred_element_type=jnp.float32) + b2_ref[0]

    o_ref[...] = (o1 + h2).reshape(bt, N, D)   # residual 2


# -------------------------------- wrapper ------------------------------------

def vit_block(x, params, *, n_heads, batch_tile=None):
    B, N, D = x.shape
    H = params["w1"].shape[1]              # mlp hidden = mlp_ratio * D

    if batch_tile is None:
        # Keep exactly 2 "parallel" grid steps when possible (one per v7x TensorCore)
        # while making each step as large as possible (amortizes per-step overhead).
        batch_tile = B // 2 if (B >= 2 and B % 2 == 0) else B
    assert B % batch_tile == 0
    grid = (B // batch_tile,)

    # Fused QKV weight (D, 3D); weights as bf16 (MXU inputs), biases / LN params f32.
    wqkv = jnp.concatenate([params["wq"], params["wk"], params["wv"]],
                           axis=1).astype(jnp.bfloat16)
    bqkv = jnp.concatenate([params["bq"], params["bk"], params["bv"]], axis=1)  # (1, 3D)
    w1 = params["w1"].astype(jnp.bfloat16)
    w2 = params["w2"].astype(jnp.bfloat16)

    def full_spec(shape):
        return pl.BlockSpec(shape, lambda b: (0,) * len(shape))

    kernel = functools.partial(vit_block_kernel, n_heads=n_heads)

    return pl.pallas_call(
        kernel,
        out_shape=jax.ShapeDtypeStruct((B, N, D), jnp.float32),
        grid_spec=pltpu.PrefetchScalarGridSpec(
            num_scalar_prefetch=0,
            grid=grid,
            in_specs=[
                pl.BlockSpec((batch_tile, N, D), lambda b: (b, 0, 0)),   # x
                full_spec((1, D)), full_spec((1, D)),                    # ln1 gamma/beta
                full_spec((D, 3 * D)), full_spec((1, 3 * D)),            # fused Wqkv, bqkv
                full_spec((1, D)), full_spec((1, D)),                    # ln2 gamma/beta
                full_spec((D, H)), full_spec((1, H)),                    # W1, b1
                full_spec((H, D)), full_spec((1, D)),                    # W2, b2
            ],
            out_specs=pl.BlockSpec((batch_tile, N, D), lambda b: (b, 0, 0)),
            scratch_shapes=[pltpu.VMEM((batch_tile, N, D), jnp.float32)],
        ),
        compiler_params=pltpu.CompilerParams(
            dimension_semantics=("parallel",),
            vmem_limit_bytes=32 * 1024 * 1024,
        ),
    )(
        x,
        params["ln1_g"], params["ln1_b"],
        wqkv, bqkv,
        params["ln2_g"], params["ln2_b"],
        w1, params["b1"], w2, params["b2"],
    )


# ----------------------- deterministic parameter setup -----------------------

def init_params(key, D, n_heads, mlp_ratio=4):
    d_head = D // n_heads
    H = mlp_ratio * D
    keys = jax.random.split(key, 16)

    def lin(k, fan_in, fan_out):
        # torch.nn.Linear default-style uniform init (deterministic via PRNGKey)
        bound = 1.0 / np.sqrt(fan_in)
        kw, kb = jax.random.split(k)
        w = jax.random.uniform(kw, (fan_out, fan_in), jnp.float32, -bound, bound)
        b = jax.random.uniform(kb, (fan_out,), jnp.float32, -bound, bound)
        return w, b

    def block_diag_proj(k):
        # n_heads independent (d_head x d_head) Linears -> one block-diagonal
        # (D, D) matrix laid out as y = x @ W (i.e. torch W.T per block).
        W = np.zeros((D, D), np.float32)
        bfull = np.zeros((D,), np.float32)
        for h, kh in enumerate(jax.random.split(k, n_heads)):
            w, b = lin(kh, d_head, d_head)
            lo = h * d_head
            W[lo:lo + d_head, lo:lo + d_head] = np.asarray(w).T
            bfull[lo:lo + d_head] = np.asarray(b)
        return jnp.asarray(W), jnp.asarray(bfull).reshape(1, D)

    wq, bq = block_diag_proj(keys[0])
    wk, bk = block_diag_proj(keys[1])
    wv, bv = block_diag_proj(keys[2])
    w1, b1 = lin(keys[3], D, H)
    w2, b2 = lin(keys[4], H, D)

    return {
        "ln1_g": jnp.ones((1, D), jnp.float32),
        "ln1_b": jnp.zeros((1, D), jnp.float32),
        "wq": wq, "bq": bq, "wk": wk, "bk": bk, "wv": wv, "bv": bv,
        "ln2_g": jnp.ones((1, D), jnp.float32),
        "ln2_b": jnp.zeros((1, D), jnp.float32),
        "w1": jnp.asarray(w1).T, "b1": jnp.asarray(b1).reshape(1, H),
        "w2": jnp.asarray(w2).T, "b2": jnp.asarray(b2).reshape(1, D),
    }


# ------------------------------ pure-JAX reference ---------------------------
# Exact module semantics: f32 everywhere, exact (erf) GELU — the kernel uses bf16
# MXU inputs + tanh GELU + approx reciprocal, hence the 2e-2 comparison tolerance.

def reference(x, p, n_heads):
    D = x.shape[-1]
    d_head = D // n_heads

    def ln(v, g, b):
        mu = jnp.mean(v, -1, keepdims=True)
        var = jnp.mean((v - mu) ** 2, -1, keepdims=True)
        return (v - mu) / jnp.sqrt(var + 1e-5) * g[0] + b[0]

    xn = ln(x, p["ln1_g"], p["ln1_b"])
    q = xn @ p["wq"] + p["bq"][0]
    k = xn @ p["wk"] + p["bk"][0]
    v = xn @ p["wv"] + p["bv"][0]
    outs = []
    for h in range(n_heads):
        sl = slice(h * d_head, (h + 1) * d_head)
        s = jnp.einsum("bnd,bmd->bnm", q[..., sl], k[..., sl]) / (d_head ** 0.5)
        a = jax.nn.softmax(s, axis=-1)
        outs.append(jnp.einsum("bnm,bmd->bnd", a, v[..., sl]))
    out1 = x + jnp.concatenate(outs, -1)
    yn = ln(out1, p["ln2_g"], p["ln2_b"])
    h1 = jax.nn.gelu(yn @ p["w1"] + p["b1"][0], approximate=False)
    return out1 + h1 @ p["w2"] + p["b2"][0]


# ---------------------------------- main --------------------------------------

if __name__ == "__main__":
    B, N, D = 2, 8, 32          # batch, tokens, hidden_d
    n_heads = 2

    key = jax.random.PRNGKey(0)
    kx, kp = jax.random.split(key)
    x = jax.random.normal(kx, (B, N, D), jnp.float32)
    params = init_params(kp, D, n_heads)

    # default: batch_tile = B // 2 -> grid=(2,), one parallel step per v7x TensorCore
    out = jax.block_until_ready(vit_block(x, params, n_heads=n_heads))

    ref = reference(x, params, n_heads)
    np.testing.assert_allclose(np.asarray(out), np.asarray(ref), rtol=2e-2, atol=2e-2)

    print("KERNEL_OK")
</pallas_src>

<mosaic_0001>
module attributes {stable_mosaic.version = 11 : i64} {
  func.func @vit_block_kernel(%arg0: i32, %arg1: memref<1x8x32xf32, #tpu.memory_space<vmem>>, %arg2: memref<1x32xf32, #tpu.memory_space<vmem>>, %arg3: memref<1x32xf32, #tpu.memory_space<vmem>>, %arg4: memref<32x96xbf16, #tpu.memory_space<vmem>>, %arg5: memref<1x96xf32, #tpu.memory_space<vmem>>, %arg6: memref<1x32xf32, #tpu.memory_space<vmem>>, %arg7: memref<1x32xf32, #tpu.memory_space<vmem>>, %arg8: memref<32x128xbf16, #tpu.memory_space<vmem>>, %arg9: memref<1x128xf32, #tpu.memory_space<vmem>>, %arg10: memref<128x32xbf16, #tpu.memory_space<vmem>>, %arg11: memref<1x32xf32, #tpu.memory_space<vmem>>, %arg12: memref<1x8x32xf32, #tpu.memory_space<vmem>>, %arg13: memref<1x8x32xf32, #tpu.memory_space<vmem>>) attributes {dimension_semantics = [#tpu.dimension_semantics<parallel>], iteration_bounds = array<i64: 2>, scalar_prefetch = 0 : i64, scratch_operands = 1 : i64, tpu.core_type = #tpu.core_type<tc>, window_params = [{transform_indices = @transform_0, window_bounds = array<i64: 1, 8, 32>}, {pipeline_mode = #tpu.pipeline_mode<synchronous>, transform_indices = @transform_1, window_bounds = array<i64: 1, 32>}, {pipeline_mode = #tpu.pipeline_mode<synchronous>, transform_indices = @transform_2, window_bounds = array<i64: 1, 32>}, {pipeline_mode = #tpu.pipeline_mode<synchronous>, transform_indices = @transform_3, window_bounds = array<i64: 32, 96>}, {pipeline_mode = #tpu.pipeline_mode<synchronous>, transform_indices = @transform_4, window_bounds = array<i64: 1, 96>}, {pipeline_mode = #tpu.pipeline_mode<synchronous>, transform_indices = @transform_5, window_bounds = array<i64: 1, 32>}, {pipeline_mode = #tpu.pipeline_mode<synchronous>, transform_indices = @transform_6, window_bounds = array<i64: 1, 32>}, {pipeline_mode = #tpu.pipeline_mode<synchronous>, transform_indices = @transform_7, window_bounds = array<i64: 32, 128>}, {pipeline_mode = #tpu.pipeline_mode<synchronous>, transform_indices = @transform_8, window_bounds = array<i64: 1, 128>}, {pipeline_mode = #tpu.pipeline_mode<synchronous>, transform_indices = @transform_9, window_bounds = array<i64: 128, 32>}, {pipeline_mode = #tpu.pipeline_mode<synchronous>, transform_indices = @transform_10, window_bounds = array<i64: 1, 32>}, {transform_indices = @transform_11, window_bounds = array<i64: 1, 8, 32>}]} {
    %c0 = arith.constant 0 : index
    %c0_0 = arith.constant 0 : index
    %c0_1 = arith.constant 0 : index
    %0 = vector.load %arg1[%c0, %c0_0, %c0_1] : memref<1x8x32xf32, #tpu.memory_space<vmem>>, vector<1x8x32xf32>
    %1 = vector.shape_cast %0 : vector<1x8x32xf32> to vector<8x32xf32>
    %c0_2 = arith.constant 0 : index
    %c0_3 = arith.constant 0 : index
    %2 = vector.load %arg2[%c0_2, %c0_3] : memref<1x32xf32, #tpu.memory_space<vmem>>, vector<1x32xf32>
    %3 = vector.shape_cast %2 : vector<1x32xf32> to vector<32xf32>
    %c0_4 = arith.constant 0 : index
    %c0_5 = arith.constant 0 : index
    %4 = vector.load %arg3[%c0_4, %c0_5] : memref<1x32xf32, #tpu.memory_space<vmem>>, vector<1x32xf32>
    %5 = vector.shape_cast %4 : vector<1x32xf32> to vector<32xf32>
    %cst = arith.constant dense<0.000000e+00> : vector<8xf32>
    %6 = vector.multi_reduction <add>, %1, %cst [1] : vector<8x32xf32> to vector<8xf32>
    %7 = vector.shape_cast %6 : vector<8xf32> to vector<8x1xf32>
    %cst_6 = arith.constant 3.200000e+01 : f32
    %8 = vector.broadcast %cst_6 : f32 to vector<8x1xf32>
    %9 = arith.divf %7, %8 : vector<8x1xf32>
    %10 = vector.broadcast %9 : vector<8x1xf32> to vector<8x32xf32>
    %11 = arith.subf %1, %10 : vector<8x32xf32>
    %12 = vector.broadcast %9 : vector<8x1xf32> to vector<8x32xf32>
    %13 = arith.subf %1, %12 : vector<8x32xf32>
    %14 = arith.mulf %11, %13 : vector<8x32xf32>
    %cst_7 = arith.constant dense<0.000000e+00> : vector<8xf32>
    %15 = vector.multi_reduction <add>, %14, %cst_7 [1] : vector<8x32xf32> to vector<8xf32>
    %16 = vector.shape_cast %15 : vector<8xf32> to vector<8x1xf32>
    %cst_8 = arith.constant 3.200000e+01 : f32
    %17 = vector.broadcast %cst_8 : f32 to vector<8x1xf32>
    %18 = arith.divf %16, %17 : vector<8x1xf32>
    %19 = vector.broadcast %9 : vector<8x1xf32> to vector<8x32xf32>
    %20 = arith.subf %1, %19 : vector<8x32xf32>
    %cst_9 = arith.constant 9.99999974E-6 : f32
    %21 = vector.broadcast %cst_9 : f32 to vector<8x1xf32>
    %22 = arith.addf %18, %21 : vector<8x1xf32>
    %23 = math.rsqrt %22 : vector<8x1xf32>
    %24 = vector.broadcast %23 : vector<8x1xf32> to vector<8x32xf32>
    %25 = arith.mulf %20, %24 : vector<8x32xf32>
    %26 = vector.shape_cast %3 : vector<32xf32> to vector<1x32xf32>
    %27 = vector.broadcast %26 : vector<1x32xf32> to vector<8x32xf32>
    %28 = arith.mulf %25, %27 : vector<8x32xf32>
    %29 = vector.shape_cast %5 : vector<32xf32> to vector<1x32xf32>
    %30 = vector.broadcast %29 : vector<1x32xf32> to vector<8x32xf32>
    %31 = arith.addf %28, %30 : vector<8x32xf32>
    %32 = arith.truncf %31 : vector<8x32xf32> to vector<8x32xbf16>
    %c0_10 = arith.constant 0 : index
    %c0_11 = arith.constant 0 : index
    %33 = vector.load %arg4[%c0_10, %c0_11] : memref<32x96xbf16, #tpu.memory_space<vmem>>, vector<32x96xbf16>
    %cst_12 = arith.constant dense<0.000000e+00> : vector<8x96xf32>
    %34 = tpu.matmul %32, %33, %cst_12 {dimension_numbers = #tpu.dot_dimension_numbers<[1], [0], [0], [1], [0, 0, 1, 1], [], []>} : vector<8x32xbf16>, vector<32x96xbf16>, vector<8x96xf32> -> vector<8x96xf32>
    %c0_13 = arith.constant 0 : index
    %c0_14 = arith.constant 0 : index
    %35 = vector.load %arg5[%c0_13, %c0_14] : memref<1x96xf32, #tpu.memory_space<vmem>>, vector<1x96xf32>
    %36 = vector.shape_cast %35 : vector<1x96xf32> to vector<96xf32>
    %37 = vector.shape_cast %36 : vector<96xf32> to vector<1x96xf32>
    %38 = vector.broadcast %37 : vector<1x96xf32> to vector<8x96xf32>
    %39 = arith.addf %34, %38 : vector<8x96xf32>
    %40 = vector.extract_strided_slice %39 {offsets = [0, 0], sizes = [8, 32], strides = [1, 1]} : vector<8x96xf32> to vector<8x32xf32>
    %41 = arith.truncf %40 : vector<8x32xf32> to vector<8x32xbf16>
    %42 = vector.shape_cast %41 : vector<8x32xbf16> to vector<1x8x32xbf16>
    %43 = vector.extract_strided_slice %39 {offsets = [0, 32], sizes = [8, 32], strides = [1, 1]} : vector<8x96xf32> to vector<8x32xf32>
    %44 = arith.truncf %43 : vector<8x32xf32> to vector<8x32xbf16>
    %45 = vector.shape_cast %44 : vector<8x32xbf16> to vector<1x8x32xbf16>
    %46 = vector.extract_strided_slice %39 {offsets = [0, 64], sizes = [8, 32], strides = [1, 1]} : vector<8x96xf32> to vector<8x32xf32>
    %47 = arith.truncf %46 : vector<8x32xf32> to vector<8x32xbf16>
    %48 = vector.shape_cast %47 : vector<8x32xbf16> to vector<1x8x32xbf16>
    %49 = vector.extract_strided_slice %42 {offsets = [0, 0, 0], sizes = [1, 8, 16], strides = [1, 1, 1]} : vector<1x8x32xbf16> to vector<1x8x16xbf16>
    %50 = vector.extract_strided_slice %45 {offsets = [0, 0, 0], sizes = [1, 8, 16], strides = [1, 1, 1]} : vector<1x8x32xbf16> to vector<1x8x16xbf16>
    %51 = vector.extract_strided_slice %48 {offsets = [0, 0, 0], sizes = [1, 8, 16], strides = [1, 1, 1]} : vector<1x8x32xbf16> to vector<1x8x16xbf16>
    "tpu.trace_start"() <{level = 10 : i32, message = "bnd,bmd->bnm"}> : () -> ()
    %cst_15 = arith.constant dense<0.000000e+00> : vector<1x8x8xf32>
    %52 = tpu.matmul %49, %50, %cst_15 {dimension_numbers = #tpu.dot_dimension_numbers<[2], [2], [1], [1], [0, 0, 0, 1, 1, 1], [0], [0]>} : vector<1x8x16xbf16>, vector<1x8x16xbf16>, vector<1x8x8xf32> -> vector<1x8x8xf32>
    "tpu.trace_stop"() : () -> ()
    %cst_16 = arith.constant 2.500000e-01 : f32
    %53 = vector.broadcast %cst_16 : f32 to vector<1x8x8xf32>
    %54 = arith.mulf %52, %53 : vector<1x8x8xf32>
    %cst_17 = arith.constant dense<0xFF800000> : vector<1x8xf32>
    %55 = vector.multi_reduction <maximumf>, %54, %cst_17 [2] : vector<1x8x8xf32> to vector<1x8xf32>
    %56 = vector.shape_cast %55 : vector<1x8xf32> to vector<1x8x1xf32>
    %57 = vector.broadcast %56 : vector<1x8x1xf32> to vector<1x8x8xf32>
    %58 = arith.subf %54, %57 : vector<1x8x8xf32>
    %59 = math.exp %58 : vector<1x8x8xf32>
    %cst_18 = arith.constant dense<0.000000e+00> : vector<1x8xf32>
    %60 = vector.multi_reduction <add>, %59, %cst_18 [2] : vector<1x8x8xf32> to vector<1x8xf32>
    %61 = vector.shape_cast %60 : vector<1x8xf32> to vector<1x8x1xf32>
    %62 = tpu.reciprocal %61 {approx = true} : vector<1x8x1xf32> -> vector<1x8x1xf32>
    %63 = vector.broadcast %62 : vector<1x8x1xf32> to vector<1x8x8xf32>
    %64 = arith.mulf %59, %63 : vector<1x8x8xf32>
    %65 = arith.truncf %64 : vector<1x8x8xf32> to vector<1x8x8xbf16>
    "tpu.trace_start"() <{level = 10 : i32, message = "bnm,bmd->bnd"}> : () -> ()
    %cst_19 = arith.constant dense<0.000000e+00> : vector<1x8x16xf32>
    %66 = tpu.matmul %65, %51, %cst_19 {dimension_numbers = #tpu.dot_dimension_numbers<[2], [1], [1], [2], [0, 0, 0, 1, 1, 2], [0], [0]>} : vector<1x8x8xbf16>, vector<1x8x16xbf16>, vector<1x8x16xf32> -> vector<1x8x16xf32>
    "tpu.trace_stop"() : () -> ()
    %c0_20 = arith.constant 0 : index
    %c0_21 = arith.constant 0 : index
    %c0_22 = arith.constant 0 : index
    %67 = vector.load %arg13[%c0_20, %c0_21, %c0_22] : memref<1x8x32xf32, #tpu.memory_space<vmem>>, vector<1x8x16xf32>
    tpu.vector_store %arg13[%c0_20, %c0_21, %c0_22], %66 {strides = array<i32>} : memref<1x8x32xf32, #tpu.memory_space<vmem>>, vector<1x8x16xf32>,
    %68 = vector.extract_strided_slice %42 {offsets = [0, 0, 16], sizes = [1, 8, 16], strides = [1, 1, 1]} : vector<1x8x32xbf16> to vector<1x8x16xbf16>
    %69 = vector.extract_strided_slice %45 {offsets = [0, 0, 16], sizes = [1, 8, 16], strides = [1, 1, 1]} : vector<1x8x32xbf16> to vector<1x8x16xbf16>
    %70 = vector.extract_strided_slice %48 {offsets = [0, 0, 16], sizes = [1, 8, 16], strides = [1, 1, 1]} : vector<1x8x32xbf16> to vector<1x8x16xbf16>
    "tpu.trace_start"() <{level = 10 : i32, message = "bnd,bmd->bnm"}> : () -> ()
    %cst_23 = arith.constant dense<0.000000e+00> : vector<1x8x8xf32>
    %71 = tpu.matmul %68, %69, %cst_23 {dimension_numbers = #tpu.dot_dimension_numbers<[2], [2], [1], [1], [0, 0, 0, 1, 1, 1], [0], [0]>} : vector<1x8x16xbf16>, vector<1x8x16xbf16>, vector<1x8x8xf32> -> vector<1x8x8xf32>
    "tpu.trace_stop"() : () -> ()
    %cst_24 = arith.constant 2.500000e-01 : f32
    %72 = vector.broadcast %cst_24 : f32 to vector<1x8x8xf32>
    %73 = arith.mulf %71, %72 : vector<1x8x8xf32>
    %cst_25 = arith.constant dense<0xFF800000> : vector<1x8xf32>
    %74 = vector.multi_reduction <maximumf>, %73, %cst_25 [2] : vector<1x8x8xf32> to vector<1x8xf32>
    %75 = vector.shape_cast %74 : vector<1x8xf32> to vector<1x8x1xf32>
    %76 = vector.broadcast %75 : vector<1x8x1xf32> to vector<1x8x8xf32>
    %77 = arith.subf %73, %76 : vector<1x8x8xf32>
    %78 = math.exp %77 : vector<1x8x8xf32>
    %cst_26 = arith.constant dense<0.000000e+00> : vector<1x8xf32>
    %79 = vector.multi_reduction <add>, %78, %cst_26 [2] : vector<1x8x8xf32> to vector<1x8xf32>
    %80 = vector.shape_cast %79 : vector<1x8xf32> to vector<1x8x1xf32>
    %81 = tpu.reciprocal %80 {approx = true} : vector<1x8x1xf32> -> vector<1x8x1xf32>
    %82 = vector.broadcast %81 : vector<1x8x1xf32> to vector<1x8x8xf32>
    %83 = arith.mulf %78, %82 : vector<1x8x8xf32>
    %84 = arith.truncf %83 : vector<1x8x8xf32> to vector<1x8x8xbf16>
    "tpu.trace_start"() <{level = 10 : i32, message = "bnm,bmd->bnd"}> : () -> ()
    %cst_27 = arith.constant dense<0.000000e+00> : vector<1x8x16xf32>
    %85 = tpu.matmul %84, %70, %cst_27 {dimension_numbers = #tpu.dot_dimension_numbers<[2], [1], [1], [2], [0, 0, 0, 1, 1, 2], [0], [0]>} : vector<1x8x8xbf16>, vector<1x8x16xbf16>, vector<1x8x16xf32> -> vector<1x8x16xf32>
    "tpu.trace_stop"() : () -> ()
    %c0_28 = arith.constant 0 : index
    %c0_29 = arith.constant 0 : index
    %c16 = arith.constant 16 : index
    %86 = vector.load %arg13[%c0_28, %c0_29, %c16] : memref<1x8x32xf32, #tpu.memory_space<vmem>>, vector<1x8x16xf32>
    tpu.vector_store %arg13[%c0_28, %c0_29, %c16], %85 {strides = array<i32>} : memref<1x8x32xf32, #tpu.memory_space<vmem>>, vector<1x8x16xf32>,
    %c0_30 = arith.constant 0 : index
    %c0_31 = arith.constant 0 : index
    %c0_32 = arith.constant 0 : index
    %87 = vector.load %arg13[%c0_30, %c0_31, %c0_32] : memref<1x8x32xf32, #tpu.memory_space<vmem>>, vector<1x8x32xf32>
    %88 = arith.addf %0, %87 : vector<1x8x32xf32>
    %89 = vector.shape_cast %88 : vector<1x8x32xf32> to vector<8x32xf32>
    %c0_33 = arith.constant 0 : index
    %c0_34 = arith.constant 0 : index
    %90 = vector.load %arg6[%c0_33, %c0_34] : memref<1x32xf32, #tpu.memory_space<vmem>>, vector<1x32xf32>
    %91 = vector.shape_cast %90 : vector<1x32xf32> to vector<32xf32>
    %c0_35 = arith.constant 0 : index
    %c0_36 = arith.constant 0 : index
    %92 = vector.load %arg7[%c0_35, %c0_36] : memref<1x32xf32, #tpu.memory_space<vmem>>, vector<1x32xf32>
    %93 = vector.shape_cast %92 : vector<1x32xf32> to vector<32xf32>
    %cst_37 = arith.constant dense<0.000000e+00> : vector<8xf32>
    %94 = vector.multi_reduction <add>, %89, %cst_37 [1] : vector<8x32xf32> to vector<8xf32>
    %95 = vector.shape_cast %94 : vector<8xf32> to vector<8x1xf32>
    %cst_38 = arith.constant 3.200000e+01 : f32
    %96 = vector.broadcast %cst_38 : f32 to vector<8x1xf32>
    %97 = arith.divf %95, %96 : vector<8x1xf32>
    %98 = vector.broadcast %97 : vector<8x1xf32> to vector<8x32xf32>
    %99 = arith.subf %89, %98 : vector<8x32xf32>
    %100 = vector.broadcast %97 : vector<8x1xf32> to vector<8x32xf32>
    %101 = arith.subf %89, %100 : vector<8x32xf32>
    %102 = arith.mulf %99, %101 : vector<8x32xf32>
    %cst_39 = arith.constant dense<0.000000e+00> : vector<8xf32>
    %103 = vector.multi_reduction <add>, %102, %cst_39 [1] : vector<8x32xf32> to vector<8xf32>
    %104 = vector.shape_cast %103 : vector<8xf32> to vector<8x1xf32>
    %cst_40 = arith.constant 3.200000e+01 : f32
    %105 = vector.broadcast %cst_40 : f32 to vector<8x1xf32>
    %106 = arith.divf %104, %105 : vector<8x1xf32>
    %107 = vector.broadcast %97 : vector<8x1xf32> to vector<8x32xf32>
    %108 = arith.subf %89, %107 : vector<8x32xf32>
    %cst_41 = arith.constant 9.99999974E-6 : f32
    %109 = vector.broadcast %cst_41 : f32 to vector<8x1xf32>
    %110 = arith.addf %106, %109 : vector<8x1xf32>
    %111 = math.rsqrt %110 : vector<8x1xf32>
    %112 = vector.broadcast %111 : vector<8x1xf32> to vector<8x32xf32>
    %113 = arith.mulf %108, %112 : vector<8x32xf32>
    %114 = vector.shape_cast %91 : vector<32xf32> to vector<1x32xf32>
    %115 = vector.broadcast %114 : vector<1x32xf32> to vector<8x32xf32>
    %116 = arith.mulf %113, %115 : vector<8x32xf32>
    %117 = vector.shape_cast %93 : vector<32xf32> to vector<1x32xf32>
    %118 = vector.broadcast %117 : vector<1x32xf32> to vector<8x32xf32>
    %119 = arith.addf %116, %118 : vector<8x32xf32>
    %120 = arith.truncf %119 : vector<8x32xf32> to vector<8x32xbf16>
    %c0_42 = arith.constant 0 : index
    %c0_43 = arith.constant 0 : index
    %121 = vector.load %arg8[%c0_42, %c0_43] : memref<32x128xbf16, #tpu.memory_space<vmem>>, vector<32x128xbf16>
    %cst_44 = arith.constant dense<0.000000e+00> : vector<8x128xf32>
    %122 = tpu.matmul %120, %121, %cst_44 {dimension_numbers = #tpu.dot_dimension_numbers<[1], [0], [0], [1], [0, 0, 1, 1], [], []>} : vector<8x32xbf16>, vector<32x128xbf16>, vector<8x128xf32> -> vector<8x128xf32>
    %c0_45 = arith.constant 0 : index
    %c0_46 = arith.constant 0 : index
    %123 = vector.load %arg9[%c0_45, %c0_46] : memref<1x128xf32, #tpu.memory_space<vmem>>, vector<1x128xf32>
    %124 = vector.shape_cast %123 : vector<1x128xf32> to vector<128xf32>
    %125 = vector.shape_cast %124 : vector<128xf32> to vector<1x128xf32>
    %126 = vector.broadcast %125 : vector<1x128xf32> to vector<8x128xf32>
    %127 = arith.addf %122, %126 : vector<8x128xf32>
    %cst_47 = arith.constant 5.000000e-01 : f32
    %128 = vector.broadcast %cst_47 : f32 to vector<8x128xf32>
    %129 = arith.mulf %128, %127 : vector<8x128xf32>
    %cst_48 = arith.constant 4.471500e-02 : f32
    %130 = vector.broadcast %cst_48 : f32 to vector<8x128xf32>
    %131 = arith.mulf %130, %127 : vector<8x128xf32>
    %132 = arith.mulf %131, %127 : vector<8x128xf32>
    %133 = arith.mulf %132, %127 : vector<8x128xf32>
    %134 = arith.addf %127, %133 : vector<8x128xf32>
    %cst_49 = arith.constant 0.797884583 : f32
    %135 = vector.broadcast %cst_49 : f32 to vector<8x128xf32>
    %136 = arith.mulf %135, %134 : vector<8x128xf32>
    %137 = math.tanh %136 : vector<8x128xf32>
    %cst_50 = arith.constant 1.000000e+00 : f32
    %138 = vector.broadcast %cst_50 : f32 to vector<8x128xf32>
    %139 = arith.addf %138, %137 : vector<8x128xf32>
    %140 = arith.mulf %129, %139 : vector<8x128xf32>
    %141 = arith.truncf %140 : vector<8x128xf32> to vector<8x128xbf16>
    %c0_51 = arith.constant 0 : index
    %c0_52 = arith.constant 0 : index
    %142 = vector.load %arg10[%c0_51, %c0_52] : memref<128x32xbf16, #tpu.memory_space<vmem>>, vector<128x32xbf16>
    %cst_53 = arith.constant dense<0.000000e+00> : vector<8x32xf32>
    %143 = tpu.matmul %141, %142, %cst_53 {dimension_numbers = #tpu.dot_dimension_numbers<[1], [0], [0], [1], [0, 0, 1, 1], [], []>} : vector<8x128xbf16>, vector<128x32xbf16>, vector<8x32xf32> -> vector<8x32xf32>
    %c0_54 = arith.constant 0 : index
    %c0_55 = arith.constant 0 : index
    %144 = vector.load %arg11[%c0_54, %c0_55] : memref<1x32xf32, #tpu.memory_space<vmem>>, vector<1x32xf32>
    %145 = vector.shape_cast %144 : vector<1x32xf32> to vector<32xf32>
    %146 = vector.shape_cast %145 : vector<32xf32> to vector<1x32xf32>
    %147 = vector.broadcast %146 : vector<1x32xf32> to vector<8x32xf32>
    %148 = arith.addf %143, %147 : vector<8x32xf32>
    %149 = arith.addf %89, %148 : vector<8x32xf32>
    %150 = vector.shape_cast %149 : vector<8x32xf32> to vector<1x8x32xf32>
    %c0_56 = arith.constant 0 : index
    %c0_57 = arith.constant 0 : index
    %c0_58 = arith.constant 0 : index
    %151 = vector.load %arg12[%c0_56, %c0_57, %c0_58] : memref<1x8x32xf32, #tpu.memory_space<vmem>>, vector<1x8x32xf32>
    tpu.vector_store %arg12[%c0_56, %c0_57, %c0_58], %150 {strides = array<i32>} : memref<1x8x32xf32, #tpu.memory_space<vmem>>, vector<1x8x32xf32>,
    return
  }
  func.func @transform_0(%arg0: i32) -> (i32, i32, i32) {
    %c0_i32 = arith.constant 0 : i32
    %c0_i32_0 = arith.constant 0 : i32
    %c0_i32_1 = arith.constant 0 : i32
    return %arg0, %c0_i32, %c0_i32_0 : i32, i32, i32
  }
  func.func @transform_1(%arg0: i32) -> (i32, i32) {
    %c0_i32 = arith.constant 0 : i32
    %c0_i32_0 = arith.constant 0 : i32
    %c0_i32_1 = arith.constant 0 : i32
    return %c0_i32, %c0_i32_0 : i32, i32
  }
  func.func @transform_2(%arg0: i32) -> (i32, i32) {
    %c0_i32 = arith.constant 0 : i32
    %c0_i32_0 = arith.constant 0 : i32
    %c0_i32_1 = arith.constant 0 : i32
    return %c0_i32, %c0_i32_0 : i32, i32
  }
  func.func @transform_3(%arg0: i32) -> (i32, i32) {
    %c0_i32 = arith.constant 0 : i32
    %c0_i32_0 = arith.constant 0 : i32
    %c0_i32_1 = arith.constant 0 : i32
    return %c0_i32, %c0_i32_0 : i32, i32
  }
  func.func @transform_4(%arg0: i32) -> (i32, i32) {
    %c0_i32 = arith.constant 0 : i32
    %c0_i32_0 = arith.constant 0 : i32
    %c0_i32_1 = arith.constant 0 : i32
    return %c0_i32, %c0_i32_0 : i32, i32
  }
  func.func @transform_5(%arg0: i32) -> (i32, i32) {
    %c0_i32 = arith.constant 0 : i32
    %c0_i32_0 = arith.constant 0 : i32
    %c0_i32_1 = arith.constant 0 : i32
    return %c0_i32, %c0_i32_0 : i32, i32
  }
  func.func @transform_6(%arg0: i32) -> (i32, i32) {
    %c0_i32 = arith.constant 0 : i32
    %c0_i32_0 = arith.constant 0 : i32
    %c0_i32_1 = arith.constant 0 : i32
    return %c0_i32, %c0_i32_0 : i32, i32
  }
  func.func @transform_7(%arg0: i32) -> (i32, i32) {
    %c0_i32 = arith.constant 0 : i32
    %c0_i32_0 = arith.constant 0 : i32
    %c0_i32_1 = arith.constant 0 : i32
    return %c0_i32, %c0_i32_0 : i32, i32
  }
  func.func @transform_8(%arg0: i32) -> (i32, i32) {
    %c0_i32 = arith.constant 0 : i32
    %c0_i32_0 = arith.constant 0 : i32
    %c0_i32_1 = arith.constant 0 : i32
    return %c0_i32, %c0_i32_0 : i32, i32
  }
  func.func @transform_9(%arg0: i32) -> (i32, i32) {
    %c0_i32 = arith.constant 0 : i32
    %c0_i32_0 = arith.constant 0 : i32
    %c0_i32_1 = arith.constant 0 : i32
    return %c0_i32, %c0_i32_0 : i32, i32
  }
  func.func @transform_10(%arg0: i32) -> (i32, i32) {
    %c0_i32 = arith.constant 0 : i32
    %c0_i32_0 = arith.constant 0 : i32
    %c0_i32_1 = arith.constant 0 : i32
    return %c0_i32, %c0_i32_0 : i32, i32
  }
  func.func @transform_11(%arg0: i32) -> (i32, i32, i32) {
    %c0_i32 = arith.constant 0 : i32
    %c0_i32_0 = arith.constant 0 : i32
    %c0_i32_1 = arith.constant 0 : i32
    return %arg0, %c0_i32, %c0_i32_0 : i32, i32, i32
  }
}

</mosaic_0001>

<llo_original>
// kernel: tpu_custom_call.1
$region0: #{tpu_custom_call.1}
  #allocation0 [shape = 'u32[]', space=smem, size = 0x4, offset = 0x4, fixed_abs, tag = 'smem constant byte address 0x4 - core index']
  #allocation1 [shape = 'u32[72,128]{1,0:T(1,128)}', space=vmem, size = 0x9000, scoped, tag = 'internal scratch']
  #allocation2 [shape = 'f32[1,8,32]{2,1,0:T(8,128)}', space=vmem, size = 0x1000, scoped, tag = 'scratch operand']
  %s0 = inlined_call_operand.vmem [shape: f32[2,8,32], index: 0, kind: input, shape index: {}]
  %s1 = inlined_call_operand.vmem [shape: f32[1,32], index: 1, kind: input, shape index: {}]
  %s2 = inlined_call_operand.vmem [shape: f32[1,32], index: 2, kind: input, shape index: {}]
  %s3 = inlined_call_operand.vmem [shape: bf16[32,96], index: 3, kind: input, shape index: {}]
  %s4 = inlined_call_operand.vmem [shape: f32[1,96], index: 4, kind: input, shape index: {}]
  %s5 = inlined_call_operand.vmem [shape: f32[1,32], index: 5, kind: input, shape index: {}]
  %s6 = inlined_call_operand.vmem [shape: f32[1,32], index: 6, kind: input, shape index: {}]
  %s7 = inlined_call_operand.vmem [shape: bf16[32,128], index: 7, kind: input, shape index: {}]
  %s8 = inlined_call_operand.vmem [shape: f32[1,128], index: 8, kind: input, shape index: {}]
  %s9 = inlined_call_operand.vmem [shape: bf16[128,32], index: 9, kind: input, shape index: {}]
  %s10 = inlined_call_operand.vmem [shape: f32[1,32], index: 10, kind: input, shape index: {}]
  %s11 = inlined_call_operand.hbm [shape: f32[2,8,32], index: 11, kind: output, shape index: {}]
  %s12 = sld [smem:[#allocation0]]
  $region77: #{tpu_custom_call.1} parent=0
    _
  %s14 = ssub.s32 1, %s12
  %s15 = scalar_select 0, %s14, %s12
  $region1: #{tpu_custom_call.1} parent=0
    #allocation3 [shape = 'u8[8192]{0}', space=vmem, size = 0x2000, scoped, tag = 'output window, operand 0']
    #allocation4 [shape = 's32[2]{0}', space=sflag, size = 0x8, scoped, tag = 'scoped memory for tpu_custom_call.1']
    %16 = vsyncpa [#allocation4], 0
    %s17 = scalar_lea.sflag [#allocation4], 1
    %18 = vsyncpa %s17, 0
    loop: start=0, step=1, limit=4
    $region2: #{tpu_custom_call.1} parent=1 // loop_pre_header
      _
    $region3: #{tpu_custom_call.1} parent=1 // loop_header
      %s20 = sphi 0, %s24
      %p21 = scmp.ge.s32.totalorder %s20, 4
      %s30 = sphi 0, %s32
      %s33 = sphi 0, %s30
      %s34 = sphi 0, %s33
      %s50 = sphi 0, %s34
      %s54 = sphi 0, %s54
      %s56 = sphi 0, %s54
      %s57 = sphi 0, %s56
      %s71 = sphi 0, %s57
      %s75 = sphi 0, %s75
      %s77 = sphi 0, %s75
      %s78 = sphi 0, %s77
      %s92 = sphi 0, %s78
      %s96 = sphi 0, %s96
      %s98 = sphi 0, %s96
      %s99 = sphi 0, %s98
      %s113 = sphi 0, %s99
      %s117 = sphi 0, %s117
      %s119 = sphi 0, %s117
      %s120 = sphi 0, %s119
      %s134 = sphi 0, %s120
      %s138 = sphi 0, %s138
      %s140 = sphi 0, %s138
      %s141 = sphi 0, %s140
      %s155 = sphi 0, %s141
      %s159 = sphi 0, %s159
      %s161 = sphi 0, %s159
      %s162 = sphi 0, %s161
      %s176 = sphi 0, %s162
      %s180 = sphi 0, %s180
      %s182 = sphi 0, %s180
      %s183 = sphi 0, %s182
      %s197 = sphi 0, %s183
      %s201 = sphi 0, %s201
      %s203 = sphi 0, %s201
      %s204 = sphi 0, %s203
      %s218 = sphi 0, %s204
      %s222 = sphi 0, %s222
      %s224 = sphi 0, %s222
      %s225 = sphi 0, %s224
      %s239 = sphi 0, %s225
      %s243 = sphi 0, %s243
      %s245 = sphi 0, %s243
      %s246 = sphi 0, %s245
      %s260 = sphi 0, %s246
      %s266 = sphi 0, %s268
      %s269 = sphi 0, %s266
      %s270 = sphi 0, %s269
      %s286 = sphi 0, %s270
    $region4: #{tpu_custom_call.1} parent=1 // loop_header_branch
      %23 = sbr.rel (%p21) target = $region8
    $region5: #{tpu_custom_call.1} parent=1 // loop_body
      %s25 = ssub.s32 %s20, 1
      %s26 = ssub.s32 %s20, 2
      %s27 = sadd.s32 %s20, 1
      %s28 = ssub.s32 %s20, %s27
      %p29 = scmp.eq.s32.totalorder %s28, 0
      %s31 = sadd.s32 %s30, 1
      %s32 = scalar_select %p29, %s30, %s31
      %p35 = pneg %p29
      %p36 = scmp.eq.s32.totalorder %s20, 1
      %p37 = por %p35, %p36
      %p38 = scmp.ne.s32.totalorder %s30, %s33
      %p39 = scmp.eq.s32.totalorder %s20, 0
      %p40 = por %p38, %p39
      %p41 = scmp.ne.s32.totalorder %s30, %s33
      %p42 = scmp.eq.s32.totalorder %s25, 1
      %p43 = por %p41, %p42
      %p44 = scmp.ne.s32.totalorder %s33, %s34
      %p45 = scmp.eq.s32.totalorder %s25, 0
      %p46 = por %p44, %p45
      %p47 = scmp.ne.s32.totalorder %s33, %s34
      %p48 = scmp.eq.s32.totalorder %s26, 1
      %p49 = por %p47, %p48
      %p51 = scmp.ne.s32.totalorder %s34, %s50
      %p52 = scmp.eq.s32.totalorder %s26, 0
      %p53 = por %p51, %p52
      %s55 = sadd.s32 %s54, 1
      %p58 = scmp.eq.s32.totalorder %s20, 1
      %p59 = scmp.ne.s32.totalorder %s54, %s56
      %p60 = scmp.eq.s32.totalorder %s20, 0
      %p61 = por %p59, %p60
      %p62 = scmp.ne.s32.totalorder %s54, %s56
      %p63 = scmp.eq.s32.totalorder %s25, 1
      %p64 = por %p62, %p63
      %p65 = scmp.ne.s32.totalorder %s56, %s57
      %p66 = scmp.eq.s32.totalorder %s25, 0
      %p67 = por %p65, %p66
      %p68 = scmp.ne.s32.totalorder %s56, %s57
      %p69 = scmp.eq.s32.totalorder %s26, 1
      %p70 = por %p68, %p69
      %p72 = scmp.ne.s32.totalorder %s57, %s71
      %p73 = scmp.eq.s32.totalorder %s26, 0
      %p74 = por %p72, %p73
      %s76 = sadd.s32 %s75, 1
      %p79 = scmp.eq.s32.totalorder %s20, 1
      %p80 = scmp.ne.s32.totalorder %s75, %s77
      %p81 = scmp.eq.s32.totalorder %s20, 0
      %p82 = por %p80, %p81
      %p83 = scmp.ne.s32.totalorder %s75, %s77
      %p84 = scmp.eq.s32.totalorder %s25, 1
      %p85 = por %p83, %p84
      %p86 = scmp.ne.s32.totalorder %s77, %s78
      %p87 = scmp.eq.s32.totalorder %s25, 0
      %p88 = por %p86, %p87
      %p89 = scmp.ne.s32.totalorder %s77, %s78
      %p90 = scmp.eq.s32.totalorder %s26, 1
      %p91 = por %p89, %p90
      %p93 = scmp.ne.s32.totalorder %s78, %s92
      %p94 = scmp.eq.s32.totalorder %s26, 0
      %p95 = por %p93, %p94
      %s97 = sadd.s32 %s96, 1
      %p100 = scmp.eq.s32.totalorder %s20, 1
      %p101 = scmp.ne.s32.totalorder %s96, %s98
      %p102 = scmp.eq.s32.totalorder %s20, 0
      %p103 = por %p101, %p102
      %p104 = scmp.ne.s32.totalorder %s96, %s98
      %p105 = scmp.eq.s32.totalorder %s25, 1
      %p106 = por %p104, %p105
      %p107 = scmp.ne.s32.totalorder %s98, %s99
      %p108 = scmp.eq.s32.totalorder %s25, 0
      %p109 = por %p107, %p108
      %p110 = scmp.ne.s32.totalorder %s98, %s99
      %p111 = scmp.eq.s32.totalorder %s26, 1
      %p112 = por %p110, %p111
      %p114 = scmp.ne.s32.totalorder %s99, %s113
      %p115 = scmp.eq.s32.totalorder %s26, 0
      %p116 = por %p114, %p115
      %s118 = sadd.s32 %s117, 1
      %p121 = scmp.eq.s32.totalorder %s20, 1
      %p122 = scmp.ne.s32.totalorder %s117, %s119
      %p123 = scmp.eq.s32.totalorder %s20, 0
      %p124 = por %p122, %p123
      %p125 = scmp.ne.s32.totalorder %s117, %s119
      %p126 = scmp.eq.s32.totalorder %s25, 1
      %p127 = por %p125, %p126
      %p128 = scmp.ne.s32.totalorder %s119, %s120
      %p129 = scmp.eq.s32.totalorder %s25, 0
      %p130 = por %p128, %p129
      %p131 = scmp.ne.s32.totalorder %s119, %s120
      %p132 = scmp.eq.s32.totalorder %s26, 1
      %p133 = por %p131, %p132
      %p135 = scmp.ne.s32.totalorder %s120, %s134
      %p136 = scmp.eq.s32.totalorder %s26, 0
      %p137 = por %p135, %p136
      %s139 = sadd.s32 %s138, 1
      %p142 = scmp.eq.s32.totalorder %s20, 1
      %p143 = scmp.ne.s32.totalorder %s138, %s140
      %p144 = scmp.eq.s32.totalorder %s20, 0
      %p145 = por %p143, %p144
      %p146 = scmp.ne.s32.totalorder %s138, %s140
      %p147 = scmp.eq.s32.totalorder %s25, 1
      %p148 = por %p146, %p147
      %p149 = scmp.ne.s32.totalorder %s140, %s141
      %p150 = scmp.eq.s32.totalorder %s25, 0
      %p151 = por %p149, %p150
      %p152 = scmp.ne.s32.totalorder %s140, %s141
      %p153 = scmp.eq.s32.totalorder %s26, 1
      %p154 = por %p152, %p153
      %p156 = scmp.ne.s32.totalorder %s141, %s155
      %p157 = scmp.eq.s32.totalorder %s26, 0
      %p158 = por %p156, %p157
      %s160 = sadd.s32 %s159, 1
      %p163 = scmp.eq.s32.totalorder %s20, 1
      %p164 = scmp.ne.s32.totalorder %s159, %s161
      %p165 = scmp.eq.s32.totalorder %s20, 0
      %p166 = por %p164, %p165
      %p167 = scmp.ne.s32.totalorder %s159, %s161
      %p168 = scmp.eq.s32.totalorder %s25, 1
      %p169 = por %p167, %p168
      %p170 = scmp.ne.s32.totalorder %s161, %s162
      %p171 = scmp.eq.s32.totalorder %s25, 0
      %p172 = por %p170, %p171
      %p173 = scmp.ne.s32.totalorder %s161, %s162
      %p174 = scmp.eq.s32.totalorder %s26, 1
      %p175 = por %p173, %p174
      %p177 = scmp.ne.s32.totalorder %s162, %s176
      %p178 = scmp.eq.s32.totalorder %s26, 0
      %p179 = por %p177, %p178
      %s181 = sadd.s32 %s180, 1
      %p184 = scmp.eq.s32.totalorder %s20, 1
      %p185 = scmp.ne.s32.totalorder %s180, %s182
      %p186 = scmp.eq.s32.totalorder %s20, 0
      %p187 = por %p185, %p186
      %p188 = scmp.ne.s32.totalorder %s180, %s182
      %p189 = scmp.eq.s32.totalorder %s25, 1
      %p190 = por %p188, %p189
      %p191 = scmp.ne.s32.totalorder %s182, %s183
      %p192 = scmp.eq.s32.totalorder %s25, 0
      %p193 = por %p191, %p192
      %p194 = scmp.ne.s32.totalorder %s182, %s183
      %p195 = scmp.eq.s32.totalorder %s26, 1
      %p196 = por %p194, %p195
      %p198 = scmp.ne.s32.totalorder %s183, %s197
      %p199 = scmp.eq.s32.totalorder %s26, 0
      %p200 = por %p198, %p199
      %s202 = sadd.s32 %s201, 1
      %p205 = scmp.eq.s32.totalorder %s20, 1
      %p206 = scmp.ne.s32.totalorder %s201, %s203
      %p207 = scmp.eq.s32.totalorder %s20, 0
      %p208 = por %p206, %p207
      %p209 = scmp.ne.s32.totalorder %s201, %s203
      %p210 = scmp.eq.s32.totalorder %s25, 1
      %p211 = por %p209, %p210
      %p212 = scmp.ne.s32.totalorder %s203, %s204
      %p213 = scmp.eq.s32.totalorder %s25, 0
      %p214 = por %p212, %p213
      %p215 = scmp.ne.s32.totalorder %s203, %s204
      %p216 = scmp.eq.s32.totalorder %s26, 1
      %p217 = por %p215, %p216
      %p219 = scmp.ne.s32.totalorder %s204, %s218
      %p220 = scmp.eq.s32.totalorder %s26, 0
      %p221 = por %p219, %p220
      %s223 = sadd.s32 %s222, 1
      %p226 = scmp.eq.s32.totalorder %s20, 1
      %p227 = scmp.ne.s32.totalorder %s222, %s224
      %p228 = scmp.eq.s32.totalorder %s20, 0
      %p229 = por %p227, %p228
      %p230 = scmp.ne.s32.totalorder %s222, %s224
      %p231 = scmp.eq.s32.totalorder %s25, 1
      %p232 = por %p230, %p231
      %p233 = scmp.ne.s32.totalorder %s224, %s225
      %p234 = scmp.eq.s32.totalorder %s25, 0
      %p235 = por %p233, %p234
      %p236 = scmp.ne.s32.totalorder %s224, %s225
      %p237 = scmp.eq.s32.totalorder %s26, 1
      %p238 = por %p236, %p237
      %p240 = scmp.ne.s32.totalorder %s225, %s239
      %p241 = scmp.eq.s32.totalorder %s26, 0
      %p242 = por %p240, %p241
      %s244 = sadd.s32 %s243, 1
      %p247 = scmp.eq.s32.totalorder %s20, 1
      %p248 = scmp.ne.s32.totalorder %s243, %s245
      %p249 = scmp.eq.s32.totalorder %s20, 0
      %p250 = por %p248, %p249
      %p251 = scmp.ne.s32.totalorder %s243, %s245
      %p252 = scmp.eq.s32.totalorder %s25, 1
      %p253 = por %p251, %p252
      %p254 = scmp.ne.s32.totalorder %s245, %s246
      %p255 = scmp.eq.s32.totalorder %s25, 0
      %p256 = por %p254, %p255
      %p257 = scmp.ne.s32.totalorder %s245, %s246
      %p258 = scmp.eq.s32.totalorder %s26, 1
      %p259 = por %p257, %p258
      %p261 = scmp.ne.s32.totalorder %s246, %s260
      %p262 = scmp.eq.s32.totalorder %s26, 0
      %p263 = por %p261, %p262
      %s264 = ssub.s32 %s20, %s27
      %p265 = scmp.eq.s32.totalorder %s264, 0
      %s267 = sadd.s32 %s266, 1
      %s268 = scalar_select %p265, %s266, %s267
      %p271 = pneg %p265
      %p272 = scmp.eq.s32.totalorder %s20, 1
      %p273 = por %p271, %p272
      %p274 = scmp.ne.s32.totalorder %s266, %s269
      %p275 = scmp.eq.s32.totalorder %s20, 0
      %p276 = por %p274, %p275
      %p277 = scmp.ne.s32.totalorder %s266, %s269
      %p278 = scmp.eq.s32.totalorder %s25, 1
      %p279 = por %p277, %p278
      %p280 = scmp.ne.s32.totalorder %s269, %s270
      %p281 = scmp.eq.s32.totalorder %s25, 0
      %p282 = por %p280, %p281
      %p283 = scmp.ne.s32.totalorder %s269, %s270
      %p284 = scmp.eq.s32.totalorder %s26, 1
      %p285 = por %p283, %p284
      %p287 = scmp.ne.s32.totalorder %s270, %s286
      %p288 = scmp.eq.s32.totalorder %s26, 0
      %p289 = por %p287, %p288
      %p290 = scmp.le.s32.totalorder 1, %s20
      %p291 = scmp.lt.s32.totalorder %s20, 3
      %p292 = pnand %p290, %p291
      %p293 = pneg %p292
      // Predicated region
      $region9: #{tpu_custom_call.1} parent=5 // pred_check
        _
      $region10: #{tpu_custom_call.1} parent=5 // pred_check_branch
        %295 = sbr.rel (%p292) target = $region12
      $region11: #{tpu_custom_call.1} parent=5 // pred_region
        %s296 = ssub.s32 %s20, 1
        // Predicated region
        $region13: #{tpu_custom_call.1} parent=11 // pred_check
          %p297 = pneg %p67
        $region14: #{tpu_custom_call.1} parent=11 // pred_check_branch
          %299 = sbr.rel (%p297) target = $region16
        $region15: #{tpu_custom_call.1} parent=11 // pred_region
          _
        $region16: #{tpu_custom_call.1} parent=11 // pred_fallthru
          _
        // Predicated region
        $region17: #{tpu_custom_call.1} parent=11 // pred_check
          %p300 = pneg %p88
        $region18: #{tpu_custom_call.1} parent=11 // pred_check_branch
          %302 = sbr.rel (%p300) target = $region20
        $region19: #{tpu_custom_call.1} parent=11 // pred_region
          _
        $region20: #{tpu_custom_call.1} parent=11 // pred_fallthru
          _
        // Predicated region
        $region21: #{tpu_custom_call.1} parent=11 // pred_check
          %p303 = pneg %p109
        $region22: #{tpu_custom_call.1} parent=11 // pred_check_branch
          %305 = sbr.rel (%p303) target = $region24
        $region23: #{tpu_custom_call.1} parent=11 // pred_region
          _
        $region24: #{tpu_custom_call.1} parent=11 // pred_fallthru
          _
        // Predicated region
        $region25: #{tpu_custom_call.1} parent=11 // pred_check
          %p306 = pneg %p130
        $region26: #{tpu_custom_call.1} parent=11 // pred_check_branch
          %308 = sbr.rel (%p306) target = $region28
        $region27: #{tpu_custom_call.1} parent=11 // pred_region
          _
        $region28: #{tpu_custom_call.1} parent=11 // pred_fallthru
          _
        // Predicated region
        $region29: #{tpu_custom_call.1} parent=11 // pred_check
          %p309 = pneg %p151
        $region30: #{tpu_custom_call.1} parent=11 // pred_check_branch
          %311 = sbr.rel (%p309) target = $region32
        $region31: #{tpu_custom_call.1} parent=11 // pred_region
          _
        $region32: #{tpu_custom_call.1} parent=11 // pred_fallthru
          _
        // Predicated region
        $region33: #{tpu_custom_call.1} parent=11 // pred_check
          %p312 = pneg %p172
        $region34: #{tpu_custom_call.1} parent=11 // pred_check_branch
          %314 = sbr.rel (%p312) target = $region36
        $region35: #{tpu_custom_call.1} parent=11 // pred_region
          _
        $region36: #{tpu_custom_call.1} parent=11 // pred_fallthru
          _
        // Predicated region
        $region37: #{tpu_custom_call.1} parent=11 // pred_check
          %p315 = pneg %p193
        $region38: #{tpu_custom_call.1} parent=11 // pred_check_branch
          %317 = sbr.rel (%p315) target = $region40
        $region39: #{tpu_custom_call.1} parent=11 // pred_region
          _
        $region40: #{tpu_custom_call.1} parent=11 // pred_fallthru
          _
        // Predicated region
        $region41: #{tpu_custom_call.1} parent=11 // pred_check
          %p318 = pneg %p214
        $region42: #{tpu_custom_call.1} parent=11 // pred_check_branch
          %320 = sbr.rel (%p318) target = $region44
        $region43: #{tpu_custom_call.1} parent=11 // pred_region
          _
        $region44: #{tpu_custom_call.1} parent=11 // pred_fallthru
          _
        // Predicated region
        $region45: #{tpu_custom_call.1} parent=11 // pred_check
          %p321 = pneg %p235
        $region46: #{tpu_custom_call.1} parent=11 // pred_check_branch
          %323 = sbr.rel (%p321) target = $region48
        $region47: #{tpu_custom_call.1} parent=11 // pred_region
          _
        $region48: #{tpu_custom_call.1} parent=11 // pred_fallthru
          _
        // Predicated region
        $region49: #{tpu_custom_call.1} parent=11 // pred_check
          %p324 = pneg %p256
        $region50: #{tpu_custom_call.1} parent=11 // pred_check_branch
          %326 = sbr.rel (%p324) target = $region52
        $region51: #{tpu_custom_call.1} parent=11 // pred_region
          _
        $region52: #{tpu_custom_call.1} parent=11 // pred_fallthru
          _
      $region12: #{tpu_custom_call.1} parent=5 // pred_fallthru
        _
      %p327 = scmp.lt.s32.totalorder %s20, 2
      // Predicated region
      $region53: #{tpu_custom_call.1} parent=5 // pred_check
        %p328 = pneg %p327
      $region54: #{tpu_custom_call.1} parent=5 // pred_check_branch
        %330 = sbr.rel (%p328) target = $region56
      $region55: #{tpu_custom_call.1} parent=5 // pred_region
        // Predicated region
        $region57: #{tpu_custom_call.1} parent=55 // pred_check
          %p331 = pneg %p40
        $region58: #{tpu_custom_call.1} parent=55 // pred_check_branch
          %333 = sbr.rel (%p331) target = $region60
        $region59: #{tpu_custom_call.1} parent=55 // pred_region
          %p334 = scmp.lt.s32.totalorder %s20, 1
          %s335 = scalar_select %p334, %s20, 1
          %s336 = smul.addr %s335, 8
          %s337 = scalar_lea.vmem %s0, %s336
        $region60: #{tpu_custom_call.1} parent=55 // pred_fallthru
          _
      $region56: #{tpu_custom_call.1} parent=5 // pred_fallthru
        _
      %p338 = scmp.le.s32.totalorder 1, %s20
      %p339 = scmp.lt.s32.totalorder %s20, 3
      %p340 = pnand %p338, %p339
      %p341 = pneg %p340
      // Predicated region
      $region61: #{tpu_custom_call.1} parent=5 // pred_check
        _
      $region62: #{tpu_custom_call.1} parent=5 // pred_check_branch
        %343 = sbr.rel (%p340) target = $region64
      $region63: #{tpu_custom_call.1} parent=5 // pred_region
        %s344 = ssub.s32 %s20, 1
        %p345 = scmp.lt.s32.totalorder %s25, 1
        %s346 = scalar_select %p345, %s25, 1
        %s347 = smul.addr %s346, 8
        %s348 = scalar_lea.vmem %s0, %s347
        %p349 = pneg %p46
        %p350 = pneg %p43
        %p351 = pneg %p67
        %p352 = pneg %p64
        %p353 = pneg %p88
        %p354 = pneg %p85
        %p355 = pneg %p109
        %p356 = pneg %p106
        %p357 = pneg %p130
        %p358 = pneg %p127
        %p359 = pneg %p151
        %p360 = pneg %p148
        %p361 = pneg %p172
        %p362 = pneg %p169
        %p363 = pneg %p193
        %p364 = pneg %p190
        %p365 = pneg %p214
        %p366 = pneg %p211
        %p367 = pneg %p235
        %p368 = pneg %p232
        %p369 = pneg %p256
        %p370 = pneg %p253
        %p371 = pneg %p282
        %p372 = pneg %p279
        %s373 = sand.u32 %s269, 1
        %s374 = scalar_lea.sflag [#allocation4], %s373
        %s375 = sand.u32 %s269, 1
        %s376 = smul.addr %s375, 8
        %s377 = scalar_lea.vmem [#allocation3], %s376
        %p378 = scmp.lt.s32.totalorder %s25, 1
        %s379 = scalar_select %p378, %s25, 1
        %s380 = smul.addr %s379, 8
        %s381 = scalar_lea.vmem %s0, %s380
        %v383 = vld [vmem:[%s381] sm:$0xff]
        %v384 = vld [vmem:[%s1] sm:$0x1]
        %v385 = vld [vmem:[%s2] sm:$0x1]
        %vm386 = vcmask 261120
        %v387 = vsel %vm386, %v383, 0.0
        %388 = vadd.xlane.f32.xlu0 %v387
        %v389 = vpop.xlane.xlu0 %388
        %v390 = vrcp.pop 32.0
        %v391 = vmul.f32 32.0, %v390
        %v392 = vsub.f32 1.0, %v391
        %v393 = vmul.f32 %v390, %v392
        %v394 = vadd.f32 %v390, %v393
        %vm395 = vweird.f32 %v390
        %v396 = vsel %vm395, %v390, %v394
        %v397 = vmul.f32 %v389, %v396
        %v398 = vsub.f32 %v383, %v397
        %v399 = vmul.f32 %v398, %v398
        %v400 = vsel %vm386, %v399, 0.0
        %401 = vadd.xlane.f32.xlu0 %v400
        %v402 = vpop.xlane.xlu0 %401
        %v403 = vmul.f32 %v402, %v396
        %v404 = vadd.f32 %v403, 1e-05
        %v405 = vrsqrt.pop %v404
        %v406 = vmul.f32 %v405, %v404
        %v407 = vmul.f32 %v406, %v405
        %v408 = vmul.f32 0.5, %v407
        %v409 = vsub.f32 1.5, %v408
        %v410 = vmul.f32 %v405, %v409
        %vm411 = vweird.f32 %v404
        %vm412 = vweird.f32 %v405
        %vm413 = vmor %vm411, %vm412
        %v414 = vsel %vm413, %v405, %v410
        %v415 = vmul.f32 %v398, %v414
        %v417 = vperm.slane %v384, 0
        %v419 = vmul.f32 %v415, %v417
        %v421 = vperm.slane %v385, 0
        %v423 = vadd.f32 %v419, %v421
        %v424 = vpack.c.bf16 %v423, %v423
        %v425 = vld [vmem:[%s3] sm:$0xf]
        %v426 = vld [vmem:[%s3 + $0x4] sm:$0xf]
        %v427 = vld [vmem:[%s3 + $0x8] sm:$0xf]
        %v428 = vld [vmem:[%s3 + $0xc] sm:$0xf]
        %v429 = vld [vmem:[%s4] sm:$0x1]
        %v431 = vperm.slane %v429, 0
        %v437 = vunpack.c.l.b16 %v425
        %v438 = vunpack.c.l.b16 %v426
        %v439 = vunpack.c.l.b16 %v427
        %v440 = vunpack.c.l.b16 %v428
        %v441 = vpack.c.b16 %v438, %v437
        %v442 = vpack.c.b16 %v440, %v439
        %v446 = vsel %vm386, %v424, 0
        %448 = vmatpush.bf16.msra.mxu0 0
        %449 = vmatpush.bf16.msra.mxu0 0
        %450 = vmatpush.bf16.msra.mxu0 0
        %451 = vmatpush.bf16.msra.mxu0 0
        %452 = vmatpush.bf16.msra.mxu0 0
        %453 = vmatpush.bf16.msra.mxu0 0
        %454 = vmatpush.bf16.msra.mxu0 %v442
        %455 = vmatpush.bf16.msra.mxu0 %v441
        %456 = vmatmul.bf16.gmra.mxu0 %v446
        %v457 = vpop.f32.mrf.mxu0
        %v458 = vadd.f32 %v431, %v457
        %v459 = vpop.f32.mrf.mxu0
        %460 = vdwg.mxu0
        %v461 = vpack.c.bf16 %v458, %v458
        %v463 = vunpack.c.l.b16 %v461
        %v464 = vpack.c.b16 %v463, %v463
        %465 = vrot.lane.b32.xlu0 %v464, 96
        %v466 = vpop.permute.xlu0 %465
        %vm467 = vcmask 130048
        %v469 = vsel %vm467, %v461, 0
        %v472 = vsel %vm467, %v466, 0
        %474 = vmatpush.bf16.xpose.msra.mxu0 0
        %475 = vmatpush.bf16.xpose.msra.mxu0 0
        %476 = vmatpush.bf16.xpose.msra.mxu0 0
        %477 = vmatpush.bf16.xpose.msra.mxu0 0
        %478 = vmatpush.bf16.xpose.msra.mxu0 0
        %479 = vmatpush.bf16.xpose.msra.mxu0 0
        %480 = vmatpush.bf16.xpose.msra.mxu0 0
        %481 = vmatpush.bf16.xpose.msra.mxu0 %v472
        %482 = vmatmul.bf16.gmra.mxu0 %v469
        %v483 = vpop.f32.mrf.mxu0
        %v484 = vadd.f32 0.0, %v483
        %v485 = vpop.f32.mrf.mxu0
        %486 = vdwg.mxu0
        %v487 = vmul.f32 %v484, 0.25
        %vm488 = vcmask 64512
        %v489 = vsel %vm488, %v487, -inf
        %490 = vmax.xlane.f32.xlu0 %v489
        %v491 = vpop.xlane.xlu0 %490
        %v492 = vsub.f32 %v487, %v491
        %v493 = vmul.f32 %v492, 1.442695
        %v494 = vpow.pop %v493
        %v495 = vsel %vm488, %v494, 0.0
        %496 = vadd.xlane.f32.xlu0 %v495
        %v497 = vpop.xlane.xlu0 %496
        %v498 = vrcp.pop %v497
        %v499 = vmul.f32 %v494, %v498
        %v500 = vpack.c.bf16 %v499, %v499
        %501 = vrot.lane.b32.xlu0 %v464, 64
        %v502 = vpop.permute.xlu0 %501
        %v504 = vsel %vm488, %v500, 0
        %vm506 = vcmask 1043456
        %v508 = vsel %vm506, %v502, 0
        %510 = vmatpush.bf16.msra.mxu0 0
        %511 = vmatpush.bf16.msra.mxu0 0
        %512 = vmatpush.bf16.msra.mxu0 0
        %513 = vmatpush.bf16.msra.mxu0 0
        %514 = vmatpush.bf16.msra.mxu0 0
        %515 = vmatpush.bf16.msra.mxu0 0
        %516 = vmatpush.bf16.msra.mxu0 0
        %517 = vmatpush.bf16.msra.mxu0 %v508
        %518 = vmatmul.bf16.gmra.mxu0 %v504
        %v519 = vpop.f32.mrf.mxu0
        %v520 = vadd.f32 0.0, %v519
        %v521 = vpop.f32.mrf.mxu0
        %522 = vdwg.mxu0
        %523 = vst.msk [vmem:[#allocation2] sm:$0xff] %vm467, %v520
        %524 = vrot.lane.b32.xlu0 %v464, 112
        %v525 = vpop.permute.xlu0 %524
        %526 = vrot.lane.b32.xlu0 %v464, 80
        %v527 = vpop.permute.xlu0 %526
        %v529 = vsel %vm467, %v525, 0
        %v532 = vsel %vm467, %v527, 0
        %534 = vmatpush.bf16.xpose.msra.mxu0 0
        %535 = vmatpush.bf16.xpose.msra.mxu0 0
        %536 = vmatpush.bf16.xpose.msra.mxu0 0
        %537 = vmatpush.bf16.xpose.msra.mxu0 0
        %538 = vmatpush.bf16.xpose.msra.mxu0 0
        %539 = vmatpush.bf16.xpose.msra.mxu0 0
        %540 = vmatpush.bf16.xpose.msra.mxu0 0
        %541 = vmatpush.bf16.xpose.msra.mxu0 %v532
        %542 = vmatmul.bf16.gmra.mxu0 %v529
        %v543 = vpop.f32.mrf.mxu0
        %v544 = vadd.f32 0.0, %v543
        %v545 = vpop.f32.mrf.mxu0
        %546 = vdwg.mxu0
        %v547 = vmul.f32 %v544, 0.25
        %v548 = vsel %vm488, %v547, -inf
        %549 = vmax.xlane.f32.xlu0 %v548
        %v550 = vpop.xlane.xlu0 %549
        %v551 = vsub.f32 %v547, %v550
        %v552 = vmul.f32 %v551, 1.442695
        %v553 = vpow.pop %v552
        %v554 = vsel %vm488, %v553, 0.0
        %555 = vadd.xlane.f32.xlu0 %v554
        %v556 = vpop.xlane.xlu0 %555
        %v557 = vrcp.pop %v556
        %v558 = vmul.f32 %v553, %v557
        %v559 = vpack.c.bf16 %v558, %v558
        %560 = vrot.lane.b32.xlu0 %v464, 48
        %v561 = vpop.permute.xlu0 %560
        %v563 = vsel %vm488, %v559, 0
        %v566 = vsel %vm506, %v561, 0
        %568 = vmatpush.bf16.msra.mxu0 0
        %569 = vmatpush.bf16.msra.mxu0 0
        %570 = vmatpush.bf16.msra.mxu0 0
        %571 = vmatpush.bf16.msra.mxu0 0
        %572 = vmatpush.bf16.msra.mxu0 0
        %573 = vmatpush.bf16.msra.mxu0 0
        %574 = vmatpush.bf16.msra.mxu0 0
        %575 = vmatpush.bf16.msra.mxu0 %v566
        %576 = vmatmul.bf16.gmra.mxu0 %v563
        %v577 = vpop.f32.mrf.mxu0
        %v578 = vadd.f32 0.0, %v577
        %v579 = vpop.f32.mrf.mxu0
        %580 = vdwg.mxu0
        %582 = vrot.lane.b32.xlu0 %v578, 16
        %v583 = vpop.permute.xlu0 %582
        %vm585 = vcmask 261248
        %586 = vst.msk [vmem:[#allocation2] sm:$0xff] %vm585, %v583
        %v587 = vld [vmem:[#allocation2] sm:$0xff]
        %v588 = vadd.f32 %v383, %v587
        %v589 = vld [vmem:[%s5] sm:$0x1]
        %v590 = vld [vmem:[%s6] sm:$0x1]
        %v591 = vsel %vm386, %v588, 0.0
        %592 = vadd.xlane.f32.xlu0 %v591
        %v593 = vpop.xlane.xlu0 %592
        %v594 = vmul.f32 %v593, %v396
        %v595 = vsub.f32 %v588, %v594
        %v596 = vmul.f32 %v595, %v595
        %v597 = vsel %vm386, %v596, 0.0
        %598 = vadd.xlane.f32.xlu0 %v597
        %v599 = vpop.xlane.xlu0 %598
        %v600 = vmul.f32 %v599, %v396
        %v601 = vadd.f32 %v600, 1e-05
        %v602 = vrsqrt.pop %v601
        %v603 = vmul.f32 %v602, %v601
        %v604 = vmul.f32 %v603, %v602
        %v605 = vmul.f32 0.5, %v604
        %v606 = vsub.f32 1.5, %v605
        %v607 = vmul.f32 %v602, %v606
        %vm608 = vweird.f32 %v601
        %vm609 = vweird.f32 %v602
        %vm610 = vmor %vm608, %vm609
        %v611 = vsel %vm610, %v602, %v607
        %v612 = vmul.f32 %v595, %v611
        %v614 = vperm.slane %v589, 0
        %v616 = vmul.f32 %v612, %v614
        %v618 = vperm.slane %v590, 0
        %v620 = vadd.f32 %v616, %v618
        %v621 = vpack.c.bf16 %v620, %v620
        %v622 = vld [vmem:[%s7] sm:$0xf]
        %v623 = vld [vmem:[%s7 + $0x4] sm:$0xf]
        %v624 = vld [vmem:[%s7 + $0x8] sm:$0xf]
        %v625 = vld [vmem:[%s7 + $0xc] sm:$0xf]
        %v626 = vld [vmem:[%s8] sm:$0x1]
        %v628 = vperm.slane %v626, 0
        %v634 = vunpack.c.l.b16 %v622
        %v635 = vunpack.c.l.b16 %v623
        %v636 = vunpack.c.l.b16 %v624
        %v637 = vunpack.c.l.b16 %v625
        %v638 = vpack.c.b16 %v635, %v634
        %v639 = vpack.c.b16 %v637, %v636
        %v643 = vsel %vm386, %v621, 0
        %645 = vmatpush.bf16.msra.mxu0 0
        %646 = vmatpush.bf16.msra.mxu0 0
        %647 = vmatpush.bf16.msra.mxu0 0
        %648 = vmatpush.bf16.msra.mxu0 0
        %649 = vmatpush.bf16.msra.mxu0 0
        %650 = vmatpush.bf16.msra.mxu0 0
        %651 = vmatpush.bf16.msra.mxu0 %v639
        %652 = vmatpush.bf16.msra.mxu0 %v638
        %653 = vmatmul.bf16.gmra.mxu0 %v643
        %v654 = vpop.f32.mrf.mxu0
        %v655 = vadd.f32 %v628, %v654
        %v656 = vpop.f32.mrf.mxu0
        %657 = vdwg.mxu0
        %v658 = vmul.f32 %v655, 0.5
        %v659 = vmul.f32 %v655, 0.044715
        %v660 = vmul.f32 %v659, %v655
        %v661 = vmul.f32 %v660, %v655
        %v662 = vadd.f32 %v655, %v661
        %v663 = vmul.f32 %v662, 0.7978846
        %v664 = vtanh.pop %v663
        %v665 = vadd.f32 %v664, 1.0
        %v666 = vmul.f32 %v658, %v665
        %v667 = vpack.c.bf16 %v666, %v666
        %v668 = vld [vmem:[%s9] sm:$0xf]
        %v669 = vld [vmem:[%s9 + $0x4] sm:$0xf]
        %v670 = vld [vmem:[%s9 + $0x8] sm:$0xf]
        %v671 = vld [vmem:[%s9 + $0xc] sm:$0xf]
        %v672 = vld [vmem:[%s9 + $0x10] sm:$0xf]
        %v673 = vld [vmem:[%s9 + $0x14] sm:$0xf]
        %v674 = vld [vmem:[%s9 + $0x18] sm:$0xf]
        %v675 = vld [vmem:[%s9 + $0x1c] sm:$0xf]
        %v676 = vld [vmem:[%s9 + $0x20] sm:$0xf]
        %v677 = vld [vmem:[%s9 + $0x24] sm:$0xf]
        %v678 = vld [vmem:[%s9 + $0x28] sm:$0xf]
        %v679 = vld [vmem:[%s9 + $0x2c] sm:$0xf]
        %v680 = vld [vmem:[%s9 + $0x30] sm:$0xf]
        %v681 = vld [vmem:[%s9 + $0x34] sm:$0xf]
        %v682 = vld [vmem:[%s9 + $0x38] sm:$0xf]
        %v683 = vld [vmem:[%s9 + $0x3c] sm:$0xf]
        %v684 = vld [vmem:[%s10] sm:$0x1]
        %v686 = vperm.slane %v684, 0
        %v704 = vunpack.c.l.b16 %v668
        %v705 = vunpack.c.l.b16 %v669
        %v706 = vunpack.c.l.b16 %v670
        %v707 = vunpack.c.l.b16 %v671
        %v708 = vunpack.c.l.b16 %v672
        %v709 = vunpack.c.l.b16 %v673
        %v710 = vunpack.c.l.b16 %v674
        %v711 = vunpack.c.l.b16 %v675
        %v712 = vunpack.c.l.b16 %v676
        %v713 = vunpack.c.l.b16 %v677
        %v714 = vunpack.c.l.b16 %v678
        %v715 = vunpack.c.l.b16 %v679
        %v716 = vunpack.c.l.b16 %v680
        %v717 = vunpack.c.l.b16 %v681
        %v718 = vunpack.c.l.b16 %v682
        %v719 = vunpack.c.l.b16 %v683
        %v720 = vpack.c.b16 %v705, %v704
        %v721 = vpack.c.b16 %v707, %v706
        %v722 = vpack.c.b16 %v709, %v708
        %v723 = vpack.c.b16 %v711, %v710
        %v724 = vpack.c.b16 %v713, %v712
        %v725 = vpack.c.b16 %v715, %v714
        %v726 = vpack.c.b16 %v717, %v716
        %v727 = vpack.c.b16 %v719, %v718
        %736 = vmatpush.bf16.msra.mxu0 %v727
        %737 = vmatpush.bf16.msra.mxu0 %v726
        %738 = vmatpush.bf16.msra.mxu0 %v725
        %739 = vmatpush.bf16.msra.mxu0 %v724
        %740 = vmatpush.bf16.msra.mxu0 %v723
        %741 = vmatpush.bf16.msra.mxu0 %v722
        %742 = vmatpush.bf16.msra.mxu0 %v721
        %743 = vmatpush.bf16.msra.mxu0 %v720
        %744 = vmatmul.bf16.gmra.mxu0 %v667
        %v745 = vpop.f32.mrf.mxu0
        %v746 = vadd.f32 %v686, %v745
        %v747 = vpop.f32.mrf.mxu0
        %748 = vdwg.mxu0
        %v749 = vadd.f32 %v588, %v746
        %750 = vst.msk [vmem:[%s377] sm:$0xff] %vm386, %v749
        %s751 = sand.u32 %s269, 1
        %s752 = scalar_lea.sflag [#allocation4], %s751
        %s753 = sand.u32 %s269, 1
        %s754 = smul.addr %s753, 8
        %s755 = scalar_lea.vmem [#allocation3], %s754
        // Predicated region
        $region65: #{tpu_custom_call.1} parent=63 // pred_check
          %p756 = pneg %p279
        $region66: #{tpu_custom_call.1} parent=63 // pred_check_branch
          %758 = sbr.rel (%p756) target = $region68
        $region67: #{tpu_custom_call.1} parent=63 // pred_region
          %760 = vsyncadd %s752, 0
          %s761 = smul.addr %s25, 8
          %s762 = scalar_lea.hbm %s11, %s761
          %s764 = sshll.u32 %s755, 4
          %s765 = int_to_ptr.vmem [resolvable:$true] %s764
          %s766 = sshll.u32 %s762, 4
          %s767 = int_to_ptr.hbm [resolvable:$true] %s766
          %769 = dma.vmem_to_hbm [thread:$0]  %s765, 128, %s767, %s752
        $region68: #{tpu_custom_call.1} parent=63 // pred_fallthru
          _
      $region64: #{tpu_custom_call.1} parent=5 // pred_fallthru
        _
      %p770 = scmp.le.s32.totalorder 2, %s20
      // Predicated region
      $region69: #{tpu_custom_call.1} parent=5 // pred_check
        %p771 = pneg %p770
      $region70: #{tpu_custom_call.1} parent=5 // pred_check_branch
        %773 = sbr.rel (%p771) target = $region72
      $region71: #{tpu_custom_call.1} parent=5 // pred_region
        %s774 = ssub.s32 %s20, 2
        // Predicated region
        $region73: #{tpu_custom_call.1} parent=71 // pred_check
          %p775 = pneg %p285
        $region74: #{tpu_custom_call.1} parent=71 // pred_check_branch
          %777 = sbr.rel (%p775) target = $region76
        $region75: #{tpu_custom_call.1} parent=71 // pred_region
          %s778 = sand.u32 %s270, 1
          %s779 = scalar_lea.sflag [#allocation4], %s778
          %s780 = sand.u32 %s270, 1
          %s781 = smul.addr %s780, 8
          %s782 = scalar_lea.vmem [#allocation3], %s781
          %784 = dma.done %s779, 128
        $region76: #{tpu_custom_call.1} parent=71 // pred_fallthru
          _
      $region72: #{tpu_custom_call.1} parent=5 // pred_fallthru
        _
    $region6: #{tpu_custom_call.1} parent=1 // loop_footer
      %s24 = sadd.s32 1, %s20
    $region7: #{tpu_custom_call.1} parent=1 // loop_footer_branch
      %19 = sbr.rel target = $region3
    $region8: #{tpu_custom_call.1} parent=1 // loop_exit
      _
    %785 = vsyncpa [#allocation4], 1
    %s786 = scalar_lea.sflag [#allocation4], 1
    %787 = vsyncpa %s786, 1

</llo_original>
